<compile_context>
chip_gen: v6e
topology: v6e:2x2x1
jax: 0.10.0
libtpu: 0.0.40
codegen_flags: <defaults>
</compile_context>

<pallas_src>
import functools

import jax
import jax.numpy as jnp
from jax.experimental import pallas as pl
from jax.experimental.pallas import tpu as pltpu

NEG_SLOPE = 0.01  # torch.nn.functional.leaky_relu default negative_slope


# ----------------------------- Pallas kernel -------------------------------- #
def _encoder_kernel(*refs, n_act_layers):
    """Fully fused encoder: all SAGEConv layers + heads in one kernel invocation.

    refs = (a_ref, x_ref, [wl, wr, b] * n_groups, o_ref)
      - groups 0 .. n_act_layers-1      : SAGEConv + leaky_relu   (conv1 + hidden layers)
      - group  n_act_layers             : conv2 (no activation)
      - group  n_act_layers + 1 (last)  : fused conv_mu / conv_logstd heads -> o_ref [N, 2*out]
    """
    a_ref, x_ref = refs[0], refs[1]
    o_ref = refs[-1]
    wb = refs[2:-1]
    n_groups = len(wb) // 3

    a = a_ref[...]          # bf16 [N, N], loaded into vregs once, reused by every layer
    x = x_ref[...]          # bf16 [N, Fin]

    for g in range(n_groups):
        wl = wb[3 * g][...]          # bf16 [Fin_g, Fout_g]   (neighbor path)
        wr = wb[3 * g + 1][...]      # bf16 [Fin_g, Fout_g]   (root path)
        b = wb[3 * g + 2][...]       # f32  [1, Fout_g]

        # mean aggregation: A @ x on the MXU, f32 accumulation
        agg = jnp.dot(a, x, preferred_element_type=jnp.float32).astype(jnp.bfloat16)
        h = (jnp.dot(agg, wl, preferred_element_type=jnp.float32)
             + jnp.dot(x, wr, preferred_element_type=jnp.float32)
             + b)
        if g < n_act_layers:
            h = jnp.where(h >= 0, h, NEG_SLOPE * h)   # leaky_relu in f32

        if g == n_groups - 1:
            o_ref[...] = h.astype(o_ref.dtype)         # [N, 2*out] = [mu | logstd]
        else:
            x = h.astype(jnp.bfloat16)                 # stays in VMEM/vregs


# ------------------------------- glue (JAX) --------------------------------- #
def build_mean_adj(edge_index, num_nodes):
    """Dense row-normalized adjacency implementing scatter-mean over incoming edges."""
    src, dst = edge_index[0], edge_index[1]
    a = jnp.zeros((num_nodes, num_nodes), jnp.float32).at[dst, src].add(1.0)
    deg = a.sum(axis=1, keepdims=True)
    return a / jnp.maximum(deg, 1.0)  # isolated nodes aggregate to zero


def init_sage_params(key, fin, fout):
    k1, k2, k3 = jax.random.split(key, 3)
    scale = 1.0 / jnp.sqrt(jnp.float32(fin))
    return {
        "wl": jax.random.uniform(k1, (fin, fout), jnp.float32, -scale, scale),
        "wr": jax.random.uniform(k2, (fin, fout), jnp.float32, -scale, scale),
        "b": jax.random.uniform(k3, (fout,), jnp.float32, -scale, scale),
    }


def init_encoder_params(key, in_channels, hidden_channels, out_channels, n_layers=2):
    keys = jax.random.split(key, n_layers + 4)
    params = {"layers": []}
    # self.layers = [conv1] + n_layers * [SAGEConv(hidden, hidden)]
    params["layers"].append(init_sage_params(keys[0], in_channels, hidden_channels))
    for i in range(n_layers):
        params["layers"].append(init_sage_params(keys[1 + i], hidden_channels, hidden_channels))
    params["conv2"] = init_sage_params(keys[n_layers + 1], hidden_channels, 2 * out_channels)
    params["conv_mu"] = init_sage_params(keys[n_layers + 2], 2 * out_channels, out_channels)
    params["conv_logstd"] = init_sage_params(keys[n_layers + 3], 2 * out_channels, out_channels)
    return params


def variational_gcn_encoder(x, edge_index, params):
    n, fin = x.shape
    out_channels = params["conv_mu"]["wl"].shape[1]

    # adjacency build (scatter-add) stays in plain JAX; kernel consumes the dense bf16 A
    a = build_mean_adj(edge_index, n).astype(jnp.bfloat16)
    x_bf = x.astype(jnp.bfloat16)

    # --- assemble per-layer (wl, wr, b) groups: conv1 + hidden layers, conv2, fused heads ---
    layer_params = []
    for p in params["layers"] + [params["conv2"]]:
        layer_params.append((p["wl"].astype(jnp.bfloat16),
                             p["wr"].astype(jnp.bfloat16),
                             p["b"].reshape(1, -1).astype(jnp.float32)))
    pm, pls = params["conv_mu"], params["conv_logstd"]
    layer_params.append((
        jnp.concatenate([pm["wl"], pls["wl"]], axis=1).astype(jnp.bfloat16),
        jnp.concatenate([pm["wr"], pls["wr"]], axis=1).astype(jnp.bfloat16),
        jnp.concatenate([pm["b"], pls["b"]]).reshape(1, -1).astype(jnp.float32),
    ))
    n_act_layers = len(params["layers"])   # conv1 + hidden layers get leaky_relu

    # --- flat inputs + full-array BlockSpecs (everything VMEM-resident; grid=(1,)) ---
    flat_inputs = [a, x_bf]
    in_specs = [pl.BlockSpec(tuple(a.shape), lambda i: (0, 0)),
                pl.BlockSpec(tuple(x_bf.shape), lambda i: (0, 0))]
    for wl, wr, b in layer_params:
        flat_inputs += [wl, wr, b]
        in_specs += [pl.BlockSpec(tuple(wl.shape), lambda i: (0, 0)),
                     pl.BlockSpec(tuple(wr.shape), lambda i: (0, 0)),
                     pl.BlockSpec(tuple(b.shape), lambda i: (0, 0))]

    # --- advisory cost estimate for the XLA scheduler ---
    flops = 0
    bytes_acc = a.size * 2 + x_bf.size * 2
    fin_cur = fin
    for wl, wr, b in layer_params:
        fout = wl.shape[1]
        flops += 2 * n * n * fin_cur              # A @ x
        flops += 2 * 2 * n * fin_cur * fout       # agg @ Wl  +  x @ Wr
        bytes_acc += (wl.size + wr.size) * 2 + b.size * 4
        fin_cur = fout
    bytes_acc += n * 2 * out_channels * 4

    fused = pl.pallas_call(
        functools.partial(_encoder_kernel, n_act_layers=n_act_layers),
        out_shape=jax.ShapeDtypeStruct((n, 2 * out_channels), jnp.float32),
        grid=(1,),
        in_specs=in_specs,
        out_specs=pl.BlockSpec((n, 2 * out_channels), lambda i: (0, 0)),
        compiler_params=pltpu.CompilerParams(dimension_semantics=("arbitrary",)),
        cost_estimate=pl.CostEstimate(flops=int(flops), transcendentals=0,
                                      bytes_accessed=int(bytes_acc)),
    )
    mu_logstd = fused(*flat_inputs)
    return mu_logstd[:, :out_channels], mu_logstd[:, out_channels:]


# --------------------------------- main -------------------------------------- #
if __name__ == "__main__":
    key = jax.random.PRNGKey(0)
    k_x, k_e, k_p = jax.random.split(key, 3)

    num_nodes = 16
    num_edges = 48
    in_channels = 8
    hidden_channels = 32
    out_channels = 8

    x = jax.random.normal(k_x, (num_nodes, in_channels), jnp.float32)
    edge_index = jax.random.randint(k_e, (2, num_edges), 0, num_nodes, jnp.int32)

    params = init_encoder_params(k_p, in_channels, hidden_channels, out_channels, n_layers=2)

    mu, logstd = jax.jit(variational_gcn_encoder)(x, edge_index, params)
    jax.block_until_ready((mu, logstd))

    assert mu.shape == (num_nodes, out_channels)
    assert logstd.shape == (num_nodes, out_channels)
    print("KERNEL_OK")
</pallas_src>

<mosaic_0001>
module attributes {stable_mosaic.version = 11 : i64} {
  func.func private @main(%arg0: i32) attributes {dimension_semantics = [#tpu.dimension_semantics<core_parallel>], iteration_bounds = array<i64: 2>, tpu.core_type = #tpu.core_type<sc_scalar_subcore>, window_params = []} {
    return
  }
}

module attributes {stable_mosaic.version = 11 : i64} {
  func.func private @main(%arg0: i32) attributes {dimension_semantics = [#tpu.dimension_semantics<core_parallel>], iteration_bounds = array<i64: 2>, tpu.core_type = #tpu.core_type<sc_scalar_subcore>, window_params = []} {
    return
  }
}

module attributes {stable_mosaic.version = 11 : i64} {
  func.func @_encoder_kernel(%arg0: i32, %arg1: memref<16x16xbf16, #tpu.memory_space<vmem>>, %arg2: memref<16x8xbf16, #tpu.memory_space<vmem>>, %arg3: memref<8x32xbf16, #tpu.memory_space<vmem>>, %arg4: memref<8x32xbf16, #tpu.memory_space<vmem>>, %arg5: memref<1x32xf32, #tpu.memory_space<vmem>>, %arg6: memref<32x32xbf16, #tpu.memory_space<vmem>>, %arg7: memref<32x32xbf16, #tpu.memory_space<vmem>>, %arg8: memref<1x32xf32, #tpu.memory_space<vmem>>, %arg9: memref<32x32xbf16, #tpu.memory_space<vmem>>, %arg10: memref<32x32xbf16, #tpu.memory_space<vmem>>, %arg11: memref<1x32xf32, #tpu.memory_space<vmem>>, %arg12: memref<32x16xbf16, #tpu.memory_space<vmem>>, %arg13: memref<32x16xbf16, #tpu.memory_space<vmem>>, %arg14: memref<1x16xf32, #tpu.memory_space<vmem>>, %arg15: memref<16x16xbf16, #tpu.memory_space<vmem>>, %arg16: memref<16x16xbf16, #tpu.memory_space<vmem>>, %arg17: memref<1x16xf32, #tpu.memory_space<vmem>>, %arg18: memref<16x16xf32, #tpu.memory_space<vmem>>) attributes {dimension_semantics = [#tpu.dimension_semantics<arbitrary>], iteration_bounds = array<i64: 1>, scalar_prefetch = 0 : i64, scratch_operands = 0 : i64, tpu.core_type = #tpu.core_type<tc>, window_params = [{pipeline_mode = #tpu.pipeline_mode<synchronous>, transform_indices = @transform_0, window_bounds = array<i64: 16, 16>}, {pipeline_mode = #tpu.pipeline_mode<synchronous>, transform_indices = @transform_1, window_bounds = array<i64: 16, 8>}, {pipeline_mode = #tpu.pipeline_mode<synchronous>, transform_indices = @transform_2, window_bounds = array<i64: 8, 32>}, {pipeline_mode = #tpu.pipeline_mode<synchronous>, transform_indices = @transform_3, window_bounds = array<i64: 8, 32>}, {pipeline_mode = #tpu.pipeline_mode<synchronous>, transform_indices = @transform_4, window_bounds = array<i64: 1, 32>}, {pipeline_mode = #tpu.pipeline_mode<synchronous>, transform_indices = @transform_5, window_bounds = array<i64: 32, 32>}, {pipeline_mode = #tpu.pipeline_mode<synchronous>, transform_indices = @transform_6, window_bounds = array<i64: 32, 32>}, {pipeline_mode = #tpu.pipeline_mode<synchronous>, transform_indices = @transform_7, window_bounds = array<i64: 1, 32>}, {pipeline_mode = #tpu.pipeline_mode<synchronous>, transform_indices = @transform_8, window_bounds = array<i64: 32, 32>}, {pipeline_mode = #tpu.pipeline_mode<synchronous>, transform_indices = @transform_9, window_bounds = array<i64: 32, 32>}, {pipeline_mode = #tpu.pipeline_mode<synchronous>, transform_indices = @transform_10, window_bounds = array<i64: 1, 32>}, {pipeline_mode = #tpu.pipeline_mode<synchronous>, transform_indices = @transform_11, window_bounds = array<i64: 32, 16>}, {pipeline_mode = #tpu.pipeline_mode<synchronous>, transform_indices = @transform_12, window_bounds = array<i64: 32, 16>}, {pipeline_mode = #tpu.pipeline_mode<synchronous>, transform_indices = @transform_13, window_bounds = array<i64: 1, 16>}, {pipeline_mode = #tpu.pipeline_mode<synchronous>, transform_indices = @transform_14, window_bounds = array<i64: 16, 16>}, {pipeline_mode = #tpu.pipeline_mode<synchronous>, transform_indices = @transform_15, window_bounds = array<i64: 16, 16>}, {pipeline_mode = #tpu.pipeline_mode<synchronous>, transform_indices = @transform_16, window_bounds = array<i64: 1, 16>}, {pipeline_mode = #tpu.pipeline_mode<synchronous>, transform_indices = @transform_17, window_bounds = array<i64: 16, 16>}]} {
    %c0 = arith.constant 0 : index
    %c0_0 = arith.constant 0 : index
    %0 = vector.load %arg1[%c0, %c0_0] : memref<16x16xbf16, #tpu.memory_space<vmem>>, vector<16x16xbf16>
    %c0_1 = arith.constant 0 : index
    %c0_2 = arith.constant 0 : index
    %1 = vector.load %arg2[%c0_1, %c0_2] : memref<16x8xbf16, #tpu.memory_space<vmem>>, vector<16x8xbf16>
    %c0_3 = arith.constant 0 : index
    %c0_4 = arith.constant 0 : index
    %2 = vector.load %arg3[%c0_3, %c0_4] : memref<8x32xbf16, #tpu.memory_space<vmem>>, vector<8x32xbf16>
    %c0_5 = arith.constant 0 : index
    %c0_6 = arith.constant 0 : index
    %3 = vector.load %arg4[%c0_5, %c0_6] : memref<8x32xbf16, #tpu.memory_space<vmem>>, vector<8x32xbf16>
    %c0_7 = arith.constant 0 : index
    %c0_8 = arith.constant 0 : index
    %4 = vector.load %arg5[%c0_7, %c0_8] : memref<1x32xf32, #tpu.memory_space<vmem>>, vector<1x32xf32>
    %cst = arith.constant dense<0.000000e+00> : vector<16x8xf32>
    %5 = tpu.matmul %0, %1, %cst {dimension_numbers = #tpu.dot_dimension_numbers<[1], [0], [0], [1], [0, 0, 1, 1], [], []>} : vector<16x16xbf16>, vector<16x8xbf16>, vector<16x8xf32> -> vector<16x8xf32>
    %6 = arith.truncf %5 : vector<16x8xf32> to vector<16x8xbf16>
    %cst_9 = arith.constant dense<0.000000e+00> : vector<16x32xf32>
    %7 = tpu.matmul %6, %2, %cst_9 {dimension_numbers = #tpu.dot_dimension_numbers<[1], [0], [0], [1], [0, 0, 1, 1], [], []>} : vector<16x8xbf16>, vector<8x32xbf16>, vector<16x32xf32> -> vector<16x32xf32>
    %cst_10 = arith.constant dense<0.000000e+00> : vector<16x32xf32>
    %8 = tpu.matmul %1, %3, %cst_10 {dimension_numbers = #tpu.dot_dimension_numbers<[1], [0], [0], [1], [0, 0, 1, 1], [], []>} : vector<16x8xbf16>, vector<8x32xbf16>, vector<16x32xf32> -> vector<16x32xf32>
    %9 = arith.addf %7, %8 : vector<16x32xf32>
    %10 = vector.broadcast %4 : vector<1x32xf32> to vector<16x32xf32>
    %11 = arith.addf %9, %10 : vector<16x32xf32>
    %cst_11 = arith.constant 0.000000e+00 : f32
    %12 = vector.broadcast %cst_11 : f32 to vector<16x32xf32>
    %13 = arith.cmpf oge, %11, %12 : vector<16x32xf32>
    %cst_12 = arith.constant 0.00999999977 : f32
    %14 = vector.broadcast %cst_12 : f32 to vector<16x32xf32>
    %15 = arith.mulf %14, %11 : vector<16x32xf32>
    %16 = arith.select %13, %11, %15 : vector<16x32xi1>, vector<16x32xf32>
    %17 = arith.truncf %16 : vector<16x32xf32> to vector<16x32xbf16>
    %c0_13 = arith.constant 0 : index
    %c0_14 = arith.constant 0 : index
    %18 = vector.load %arg6[%c0_13, %c0_14] : memref<32x32xbf16, #tpu.memory_space<vmem>>, vector<32x32xbf16>
    %c0_15 = arith.constant 0 : index
    %c0_16 = arith.constant 0 : index
    %19 = vector.load %arg7[%c0_15, %c0_16] : memref<32x32xbf16, #tpu.memory_space<vmem>>, vector<32x32xbf16>
    %c0_17 = arith.constant 0 : index
    %c0_18 = arith.constant 0 : index
    %20 = vector.load %arg8[%c0_17, %c0_18] : memref<1x32xf32, #tpu.memory_space<vmem>>, vector<1x32xf32>
    %cst_19 = arith.constant dense<0.000000e+00> : vector<16x32xf32>
    %21 = tpu.matmul %0, %17, %cst_19 {dimension_numbers = #tpu.dot_dimension_numbers<[1], [0], [0], [1], [0, 0, 1, 1], [], []>} : vector<16x16xbf16>, vector<16x32xbf16>, vector<16x32xf32> -> vector<16x32xf32>
    %22 = arith.truncf %21 : vector<16x32xf32> to vector<16x32xbf16>
    %cst_20 = arith.constant dense<0.000000e+00> : vector<16x32xf32>
    %23 = tpu.matmul %22, %18, %cst_20 {dimension_numbers = #tpu.dot_dimension_numbers<[1], [0], [0], [1], [0, 0, 1, 1], [], []>} : vector<16x32xbf16>, vector<32x32xbf16>, vector<16x32xf32> -> vector<16x32xf32>
    %cst_21 = arith.constant dense<0.000000e+00> : vector<16x32xf32>
    %24 = tpu.matmul %17, %19, %cst_21 {dimension_numbers = #tpu.dot_dimension_numbers<[1], [0], [0], [1], [0, 0, 1, 1], [], []>} : vector<16x32xbf16>, vector<32x32xbf16>, vector<16x32xf32> -> vector<16x32xf32>
    %25 = arith.addf %23, %24 : vector<16x32xf32>
    %26 = vector.broadcast %20 : vector<1x32xf32> to vector<16x32xf32>
    %27 = arith.addf %25, %26 : vector<16x32xf32>
    %cst_22 = arith.constant 0.000000e+00 : f32
    %28 = vector.broadcast %cst_22 : f32 to vector<16x32xf32>
    %29 = arith.cmpf oge, %27, %28 : vector<16x32xf32>
    %cst_23 = arith.constant 0.00999999977 : f32
    %30 = vector.broadcast %cst_23 : f32 to vector<16x32xf32>
    %31 = arith.mulf %30, %27 : vector<16x32xf32>
    %32 = arith.select %29, %27, %31 : vector<16x32xi1>, vector<16x32xf32>
    %33 = arith.truncf %32 : vector<16x32xf32> to vector<16x32xbf16>
    %c0_24 = arith.constant 0 : index
    %c0_25 = arith.constant 0 : index
    %34 = vector.load %arg9[%c0_24, %c0_25] : memref<32x32xbf16, #tpu.memory_space<vmem>>, vector<32x32xbf16>
    %c0_26 = arith.constant 0 : index
    %c0_27 = arith.constant 0 : index
    %35 = vector.load %arg10[%c0_26, %c0_27] : memref<32x32xbf16, #tpu.memory_space<vmem>>, vector<32x32xbf16>
    %c0_28 = arith.constant 0 : index
    %c0_29 = arith.constant 0 : index
    %36 = vector.load %arg11[%c0_28, %c0_29] : memref<1x32xf32, #tpu.memory_space<vmem>>, vector<1x32xf32>
    %cst_30 = arith.constant dense<0.000000e+00> : vector<16x32xf32>
    %37 = tpu.matmul %0, %33, %cst_30 {dimension_numbers = #tpu.dot_dimension_numbers<[1], [0], [0], [1], [0, 0, 1, 1], [], []>} : vector<16x16xbf16>, vector<16x32xbf16>, vector<16x32xf32> -> vector<16x32xf32>
    %38 = arith.truncf %37 : vector<16x32xf32> to vector<16x32xbf16>
    %cst_31 = arith.constant dense<0.000000e+00> : vector<16x32xf32>
    %39 = tpu.matmul %38, %34, %cst_31 {dimension_numbers = #tpu.dot_dimension_numbers<[1], [0], [0], [1], [0, 0, 1, 1], [], []>} : vector<16x32xbf16>, vector<32x32xbf16>, vector<16x32xf32> -> vector<16x32xf32>
    %cst_32 = arith.constant dense<0.000000e+00> : vector<16x32xf32>
    %40 = tpu.matmul %33, %35, %cst_32 {dimension_numbers = #tpu.dot_dimension_numbers<[1], [0], [0], [1], [0, 0, 1, 1], [], []>} : vector<16x32xbf16>, vector<32x32xbf16>, vector<16x32xf32> -> vector<16x32xf32>
    %41 = arith.addf %39, %40 : vector<16x32xf32>
    %42 = vector.broadcast %36 : vector<1x32xf32> to vector<16x32xf32>
    %43 = arith.addf %41, %42 : vector<16x32xf32>
    %cst_33 = arith.constant 0.000000e+00 : f32
    %44 = vector.broadcast %cst_33 : f32 to vector<16x32xf32>
    %45 = arith.cmpf oge, %43, %44 : vector<16x32xf32>
    %cst_34 = arith.constant 0.00999999977 : f32
    %46 = vector.broadcast %cst_34 : f32 to vector<16x32xf32>
    %47 = arith.mulf %46, %43 : vector<16x32xf32>
    %48 = arith.select %45, %43, %47 : vector<16x32xi1>, vector<16x32xf32>
    %49 = arith.truncf %48 : vector<16x32xf32> to vector<16x32xbf16>
    %c0_35 = arith.constant 0 : index
    %c0_36 = arith.constant 0 : index
    %50 = vector.load %arg12[%c0_35, %c0_36] : memref<32x16xbf16, #tpu.memory_space<vmem>>, vector<32x16xbf16>
    %c0_37 = arith.constant 0 : index
    %c0_38 = arith.constant 0 : index
    %51 = vector.load %arg13[%c0_37, %c0_38] : memref<32x16xbf16, #tpu.memory_space<vmem>>, vector<32x16xbf16>
    %c0_39 = arith.constant 0 : index
    %c0_40 = arith.constant 0 : index
    %52 = vector.load %arg14[%c0_39, %c0_40] : memref<1x16xf32, #tpu.memory_space<vmem>>, vector<1x16xf32>
    %cst_41 = arith.constant dense<0.000000e+00> : vector<16x32xf32>
    %53 = tpu.matmul %0, %49, %cst_41 {dimension_numbers = #tpu.dot_dimension_numbers<[1], [0], [0], [1], [0, 0, 1, 1], [], []>} : vector<16x16xbf16>, vector<16x32xbf16>, vector<16x32xf32> -> vector<16x32xf32>
    %54 = arith.truncf %53 : vector<16x32xf32> to vector<16x32xbf16>
    %cst_42 = arith.constant dense<0.000000e+00> : vector<16x16xf32>
    %55 = tpu.matmul %54, %50, %cst_42 {dimension_numbers = #tpu.dot_dimension_numbers<[1], [0], [0], [1], [0, 0, 1, 1], [], []>} : vector<16x32xbf16>, vector<32x16xbf16>, vector<16x16xf32> -> vector<16x16xf32>
    %cst_43 = arith.constant dense<0.000000e+00> : vector<16x16xf32>
    %56 = tpu.matmul %49, %51, %cst_43 {dimension_numbers = #tpu.dot_dimension_numbers<[1], [0], [0], [1], [0, 0, 1, 1], [], []>} : vector<16x32xbf16>, vector<32x16xbf16>, vector<16x16xf32> -> vector<16x16xf32>
    %57 = arith.addf %55, %56 : vector<16x16xf32>
    %58 = vector.broadcast %52 : vector<1x16xf32> to vector<16x16xf32>
    %59 = arith.addf %57, %58 : vector<16x16xf32>
    %60 = arith.truncf %59 : vector<16x16xf32> to vector<16x16xbf16>
    %c0_44 = arith.constant 0 : index
    %c0_45 = arith.constant 0 : index
    %61 = vector.load %arg15[%c0_44, %c0_45] : memref<16x16xbf16, #tpu.memory_space<vmem>>, vector<16x16xbf16>
    %c0_46 = arith.constant 0 : index
    %c0_47 = arith.constant 0 : index
    %62 = vector.load %arg16[%c0_46, %c0_47] : memref<16x16xbf16, #tpu.memory_space<vmem>>, vector<16x16xbf16>
    %c0_48 = arith.constant 0 : index
    %c0_49 = arith.constant 0 : index
    %63 = vector.load %arg17[%c0_48, %c0_49] : memref<1x16xf32, #tpu.memory_space<vmem>>, vector<1x16xf32>
    %cst_50 = arith.constant dense<0.000000e+00> : vector<16x16xf32>
    %64 = tpu.matmul %0, %60, %cst_50 {dimension_numbers = #tpu.dot_dimension_numbers<[1], [0], [0], [1], [0, 0, 1, 1], [], []>} : vector<16x16xbf16>, vector<16x16xbf16>, vector<16x16xf32> -> vector<16x16xf32>
    %65 = arith.truncf %64 : vector<16x16xf32> to vector<16x16xbf16>
    %cst_51 = arith.constant dense<0.000000e+00> : vector<16x16xf32>
    %66 = tpu.matmul %65, %61, %cst_51 {dimension_numbers = #tpu.dot_dimension_numbers<[1], [0], [0], [1], [0, 0, 1, 1], [], []>} : vector<16x16xbf16>, vector<16x16xbf16>, vector<16x16xf32> -> vector<16x16xf32>
    %cst_52 = arith.constant dense<0.000000e+00> : vector<16x16xf32>
    %67 = tpu.matmul %60, %62, %cst_52 {dimension_numbers = #tpu.dot_dimension_numbers<[1], [0], [0], [1], [0, 0, 1, 1], [], []>} : vector<16x16xbf16>, vector<16x16xbf16>, vector<16x16xf32> -> vector<16x16xf32>
    %68 = arith.addf %66, %67 : vector<16x16xf32>
    %69 = vector.broadcast %63 : vector<1x16xf32> to vector<16x16xf32>
    %70 = arith.addf %68, %69 : vector<16x16xf32>
    %c0_53 = arith.constant 0 : index
    %c0_54 = arith.constant 0 : index
    %71 = vector.load %arg18[%c0_53, %c0_54] : memref<16x16xf32, #tpu.memory_space<vmem>>, vector<16x16xf32>
    tpu.vector_store %arg18[%c0_53, %c0_54], %70 {strides = array<i32>} : memref<16x16xf32, #tpu.memory_space<vmem>>, vector<16x16xf32>,
    return
  }
  func.func @transform_0(%arg0: i32) -> (i32, i32) {
    %c0_i32 = arith.constant 0 : i32
    %c0_i32_0 = arith.constant 0 : i32
    %c0_i32_1 = arith.constant 0 : i32
    return %c0_i32, %c0_i32_0 : i32, i32
  }
  func.func @transform_1(%arg0: i32) -> (i32, i32) {
    %c0_i32 = arith.constant 0 : i32
    %c0_i32_0 = arith.constant 0 : i32
    %c0_i32_1 = arith.constant 0 : i32
    return %c0_i32, %c0_i32_0 : i32, i32
  }
  func.func @transform_2(%arg0: i32) -> (i32, i32) {
    %c0_i32 = arith.constant 0 : i32
    %c0_i32_0 = arith.constant 0 : i32
    %c0_i32_1 = arith.constant 0 : i32
    return %c0_i32, %c0_i32_0 : i32, i32
  }
  func.func @transform_3(%arg0: i32) -> (i32, i32) {
    %c0_i32 = arith.constant 0 : i32
    %c0_i32_0 = arith.constant 0 : i32
    %c0_i32_1 = arith.constant 0 : i32
    return %c0_i32, %c0_i32_0 : i32, i32
  }
  func.func @transform_4(%arg0: i32) -> (i32, i32) {
    %c0_i32 = arith.constant 0 : i32
    %c0_i32_0 = arith.constant 0 : i32
    %c0_i32_1 = arith.constant 0 : i32
    return %c0_i32, %c0_i32_0 : i32, i32
  }
  func.func @transform_5(%arg0: i32) -> (i32, i32) {
    %c0_i32 = arith.constant 0 : i32
    %c0_i32_0 = arith.constant 0 : i32
    %c0_i32_1 = arith.constant 0 : i32
    return %c0_i32, %c0_i32_0 : i32, i32
  }
  func.func @transform_6(%arg0: i32) -> (i32, i32) {
    %c0_i32 = arith.constant 0 : i32
    %c0_i32_0 = arith.constant 0 : i32
    %c0_i32_1 = arith.constant 0 : i32
    return %c0_i32, %c0_i32_0 : i32, i32
  }
  func.func @transform_7(%arg0: i32) -> (i32, i32) {
    %c0_i32 = arith.constant 0 : i32
    %c0_i32_0 = arith.constant 0 : i32
    %c0_i32_1 = arith.constant 0 : i32
    return %c0_i32, %c0_i32_0 : i32, i32
  }
  func.func @transform_8(%arg0: i32) -> (i32, i32) {
    %c0_i32 = arith.constant 0 : i32
    %c0_i32_0 = arith.constant 0 : i32
    %c0_i32_1 = arith.constant 0 : i32
    return %c0_i32, %c0_i32_0 : i32, i32
  }
  func.func @transform_9(%arg0: i32) -> (i32, i32) {
    %c0_i32 = arith.constant 0 : i32
    %c0_i32_0 = arith.constant 0 : i32
    %c0_i32_1 = arith.constant 0 : i32
    return %c0_i32, %c0_i32_0 : i32, i32
  }
  func.func @transform_10(%arg0: i32) -> (i32, i32) {
    %c0_i32 = arith.constant 0 : i32
    %c0_i32_0 = arith.constant 0 : i32
    %c0_i32_1 = arith.constant 0 : i32
    return %c0_i32, %c0_i32_0 : i32, i32
  }
  func.func @transform_11(%arg0: i32) -> (i32, i32) {
    %c0_i32 = arith.constant 0 : i32
    %c0_i32_0 = arith.constant 0 : i32
    %c0_i32_1 = arith.constant 0 : i32
    return %c0_i32, %c0_i32_0 : i32, i32
  }
  func.func @transform_12(%arg0: i32) -> (i32, i32) {
    %c0_i32 = arith.constant 0 : i32
    %c0_i32_0 = arith.constant 0 : i32
    %c0_i32_1 = arith.constant 0 : i32
    return %c0_i32, %c0_i32_0 : i32, i32
  }
  func.func @transform_13(%arg0: i32) -> (i32, i32) {
    %c0_i32 = arith.constant 0 : i32
    %c0_i32_0 = arith.constant 0 : i32
    %c0_i32_1 = arith.constant 0 : i32
    return %c0_i32, %c0_i32_0 : i32, i32
  }
  func.func @transform_14(%arg0: i32) -> (i32, i32) {
    %c0_i32 = arith.constant 0 : i32
    %c0_i32_0 = arith.constant 0 : i32
    %c0_i32_1 = arith.constant 0 : i32
    return %c0_i32, %c0_i32_0 : i32, i32
  }
  func.func @transform_15(%arg0: i32) -> (i32, i32) {
    %c0_i32 = arith.constant 0 : i32
    %c0_i32_0 = arith.constant 0 : i32
    %c0_i32_1 = arith.constant 0 : i32
    return %c0_i32, %c0_i32_0 : i32, i32
  }
  func.func @transform_16(%arg0: i32) -> (i32, i32) {
    %c0_i32 = arith.constant 0 : i32
    %c0_i32_0 = arith.constant 0 : i32
    %c0_i32_1 = arith.constant 0 : i32
    return %c0_i32, %c0_i32_0 : i32, i32
  }
  func.func @transform_17(%arg0: i32) -> (i32, i32) {
    %c0_i32 = arith.constant 0 : i32
    %c0_i32_0 = arith.constant 0 : i32
    %c0_i32_1 = arith.constant 0 : i32
    return %c0_i32, %c0_i32_0 : i32, i32
  }
}

</mosaic_0001>

<llo_original>
// kernel: variational_gcn_encoder.1
$region0: #{variational_gcn_encoder.1}
  #allocation0 [shape = 'u32[]', space=smem, size = 0x4, offset = 0x4, fixed_abs, tag = 'smem constant byte address 0x4 - core index']
  #allocation1 [shape = 'u32[144,128]{1,0:T(1,128)}', space=vmem, size = 0x12000, scoped, tag = 'internal scratch']
  %s0 = inlined_call_operand.vmem [shape: bf16[16,16], index: 0, kind: input, shape index: {}]
  %s1 = inlined_call_operand.vmem [shape: bf16[16,8], index: 1, kind: input, shape index: {}]
  %s2 = inlined_call_operand.vmem [shape: bf16[8,32], index: 2, kind: input, shape index: {}]
  %s3 = inlined_call_operand.vmem [shape: bf16[8,32], index: 3, kind: input, shape index: {}]
  %s4 = inlined_call_operand.vmem [shape: f32[1,32], index: 4, kind: input, shape index: {}]
  %s5 = inlined_call_operand.vmem [shape: bf16[32,32], index: 5, kind: input, shape index: {}]
  %s6 = inlined_call_operand.vmem [shape: bf16[32,32], index: 6, kind: input, shape index: {}]
  %s7 = inlined_call_operand.vmem [shape: f32[1,32], index: 7, kind: input, shape index: {}]
  %s8 = inlined_call_operand.vmem [shape: bf16[32,32], index: 8, kind: input, shape index: {}]
  %s9 = inlined_call_operand.vmem [shape: bf16[32,32], index: 9, kind: input, shape index: {}]
  %s10 = inlined_call_operand.vmem [shape: f32[1,32], index: 10, kind: input, shape index: {}]
  %s11 = inlined_call_operand.vmem [shape: bf16[32,16], index: 11, kind: input, shape index: {}]
  %s12 = inlined_call_operand.vmem [shape: bf16[32,16], index: 12, kind: input, shape index: {}]
  %s13 = inlined_call_operand.vmem [shape: f32[1,16], index: 13, kind: input, shape index: {}]
  %s14 = inlined_call_operand.vmem [shape: bf16[16,16], index: 14, kind: input, shape index: {}]
  %s15 = inlined_call_operand.vmem [shape: bf16[16,16], index: 15, kind: input, shape index: {}]
  %s16 = inlined_call_operand.vmem [shape: f32[1,16], index: 16, kind: input, shape index: {}]
  %s17 = inlined_call_operand.vmem [shape: f32[16,16], index: 17, kind: output, shape index: {}]
  %s18 = sld [smem:[#allocation0]]
  $region78: #{variational_gcn_encoder.1} parent=0
    _
  %s20 = ssub.s32 1, %s18
  %s21 = scalar_select 0, %s20, %s18
  // Predicated region
  $region2: #{variational_gcn_encoder.1} parent=0 // pred_check
    _
  $region3: #{variational_gcn_encoder.1} parent=0 // pred_check_branch
    %23 = sbr.rel (0) target = $region5
  $region4: #{variational_gcn_encoder.1} parent=0 // pred_region
    _
  $region5: #{variational_gcn_encoder.1} parent=0 // pred_fallthru
    _
  // Predicated region
  $region6: #{variational_gcn_encoder.1} parent=0 // pred_check
    _
  $region7: #{variational_gcn_encoder.1} parent=0 // pred_check_branch
    %25 = sbr.rel (0) target = $region9
  $region8: #{variational_gcn_encoder.1} parent=0 // pred_region
    _
  $region9: #{variational_gcn_encoder.1} parent=0 // pred_fallthru
    _
  // Predicated region
  $region10: #{variational_gcn_encoder.1} parent=0 // pred_check
    _
  $region11: #{variational_gcn_encoder.1} parent=0 // pred_check_branch
    %27 = sbr.rel (0) target = $region13
  $region12: #{variational_gcn_encoder.1} parent=0 // pred_region
    _
  $region13: #{variational_gcn_encoder.1} parent=0 // pred_fallthru
    _
  // Predicated region
  $region14: #{variational_gcn_encoder.1} parent=0 // pred_check
    _
  $region15: #{variational_gcn_encoder.1} parent=0 // pred_check_branch
    %29 = sbr.rel (0) target = $region17
  $region16: #{variational_gcn_encoder.1} parent=0 // pred_region
    _
  $region17: #{variational_gcn_encoder.1} parent=0 // pred_fallthru
    _
  // Predicated region
  $region18: #{variational_gcn_encoder.1} parent=0 // pred_check
    _
  $region19: #{variational_gcn_encoder.1} parent=0 // pred_check_branch
    %31 = sbr.rel (0) target = $region21
  $region20: #{variational_gcn_encoder.1} parent=0 // pred_region
    _
  $region21: #{variational_gcn_encoder.1} parent=0 // pred_fallthru
    _
  // Predicated region
  $region22: #{variational_gcn_encoder.1} parent=0 // pred_check
    _
  $region23: #{variational_gcn_encoder.1} parent=0 // pred_check_branch
    %33 = sbr.rel (0) target = $region25
  $region24: #{variational_gcn_encoder.1} parent=0 // pred_region
    _
  $region25: #{variational_gcn_encoder.1} parent=0 // pred_fallthru
    _
  // Predicated region
  $region26: #{variational_gcn_encoder.1} parent=0 // pred_check
    _
  $region27: #{variational_gcn_encoder.1} parent=0 // pred_check_branch
    %35 = sbr.rel (0) target = $region29
  $region28: #{variational_gcn_encoder.1} parent=0 // pred_region
    _
  $region29: #{variational_gcn_encoder.1} parent=0 // pred_fallthru
    _
  // Predicated region
  $region30: #{variational_gcn_encoder.1} parent=0 // pred_check
    _
  $region31: #{variational_gcn_encoder.1} parent=0 // pred_check_branch
    %37 = sbr.rel (0) target = $region33
  $region32: #{variational_gcn_encoder.1} parent=0 // pred_region
    _
  $region33: #{variational_gcn_encoder.1} parent=0 // pred_fallthru
    _
  // Predicated region
  $region34: #{variational_gcn_encoder.1} parent=0 // pred_check
    _
  $region35: #{variational_gcn_encoder.1} parent=0 // pred_check_branch
    %39 = sbr.rel (0) target = $region37
  $region36: #{variational_gcn_encoder.1} parent=0 // pred_region
    _
  $region37: #{variational_gcn_encoder.1} parent=0 // pred_fallthru
    _
  // Predicated region
  $region38: #{variational_gcn_encoder.1} parent=0 // pred_check
    _
  $region39: #{variational_gcn_encoder.1} parent=0 // pred_check_branch
    %41 = sbr.rel (0) target = $region41
  $region40: #{variational_gcn_encoder.1} parent=0 // pred_region
    _
  $region41: #{variational_gcn_encoder.1} parent=0 // pred_fallthru
    _
  // Predicated region
  $region42: #{variational_gcn_encoder.1} parent=0 // pred_check
    _
  $region43: #{variational_gcn_encoder.1} parent=0 // pred_check_branch
    %43 = sbr.rel (0) target = $region45
  $region44: #{variational_gcn_encoder.1} parent=0 // pred_region
    _
  $region45: #{variational_gcn_encoder.1} parent=0 // pred_fallthru
    _
  // Predicated region
  $region46: #{variational_gcn_encoder.1} parent=0 // pred_check
    _
  $region47: #{variational_gcn_encoder.1} parent=0 // pred_check_branch
    %45 = sbr.rel (0) target = $region49
  $region48: #{variational_gcn_encoder.1} parent=0 // pred_region
    _
  $region49: #{variational_gcn_encoder.1} parent=0 // pred_fallthru
    _
  // Predicated region
  $region50: #{variational_gcn_encoder.1} parent=0 // pred_check
    _
  $region51: #{variational_gcn_encoder.1} parent=0 // pred_check_branch
    %47 = sbr.rel (0) target = $region53
  $region52: #{variational_gcn_encoder.1} parent=0 // pred_region
    _
  $region53: #{variational_gcn_encoder.1} parent=0 // pred_fallthru
    _
  // Predicated region
  $region54: #{variational_gcn_encoder.1} parent=0 // pred_check
    _
  $region55: #{variational_gcn_encoder.1} parent=0 // pred_check_branch
    %49 = sbr.rel (0) target = $region57
  $region56: #{variational_gcn_encoder.1} parent=0 // pred_region
    _
  $region57: #{variational_gcn_encoder.1} parent=0 // pred_fallthru
    _
  // Predicated region
  $region58: #{variational_gcn_encoder.1} parent=0 // pred_check
    _
  $region59: #{variational_gcn_encoder.1} parent=0 // pred_check_branch
    %51 = sbr.rel (0) target = $region61
  $region60: #{variational_gcn_encoder.1} parent=0 // pred_region
    _
  $region61: #{variational_gcn_encoder.1} parent=0 // pred_fallthru
    _
  // Predicated region
  $region62: #{variational_gcn_encoder.1} parent=0 // pred_check
    _
  $region63: #{variational_gcn_encoder.1} parent=0 // pred_check_branch
    %53 = sbr.rel (0) target = $region65
  $region64: #{variational_gcn_encoder.1} parent=0 // pred_region
    _
  $region65: #{variational_gcn_encoder.1} parent=0 // pred_fallthru
    _
  // Predicated region
  $region66: #{variational_gcn_encoder.1} parent=0 // pred_check
    _
  $region67: #{variational_gcn_encoder.1} parent=0 // pred_check_branch
    %55 = sbr.rel (0) target = $region69
  $region68: #{variational_gcn_encoder.1} parent=0 // pred_region
    _
  $region69: #{variational_gcn_encoder.1} parent=0 // pred_fallthru
    _
  %v57 = vld [vmem:[%s0] sm:$0xf]
  %v58 = vld [vmem:[%s0 + $0x4] sm:$0xf]
  %v59 = vld [vmem:[%s1] sm:$0xf]
  %v60 = vld [vmem:[%s1 + $0x4] sm:$0xf]
  %v61 = vld [vmem:[%s2] sm:$0xf]
  %v62 = vld [vmem:[%s3] sm:$0xf]
  %v63 = vld [vmem:[%s4] sm:$0x1]
  %v66 = vunpack.c.l.b16 %v57
  %v67 = vunpack.c.l.b16 %v58
  %v68 = vpack.c.b16 %v67, %v66
  %v71 = vunpack.c.l.b16 %v59
  %v72 = vunpack.c.l.b16 %v60
  %v73 = vpack.c.b16 %v72, %v71
  %vm75 = vcmask 130048
  %v77 = vsel %vm75, %v68, 0
  %79 = vmatprep.subr.bf16.mxu0 0
  %80 = vmatpush1.bf16.msra.mxu0 0
  %81 = vmatprep.subr.bf16.mxu0 0
  %82 = vmatpush1.bf16.msra.mxu0 0
  %83 = vmatprep.subr.bf16.mxu0 0
  %84 = vmatpush1.bf16.msra.mxu0 0
  %85 = vmatprep.subr.bf16.mxu0 0
  %86 = vmatpush1.bf16.msra.mxu0 0
  %87 = vmatprep.subr.bf16.mxu0 0
  %88 = vmatpush1.bf16.msra.mxu0 0
  %89 = vmatprep.subr.bf16.mxu0 0
  %90 = vmatpush1.bf16.msra.mxu0 0
  %91 = vmatprep.subr.bf16.mxu0 0
  %92 = vmatpush1.bf16.msra.mxu0 0
  %93 = vmatprep.subr.bf16.mxu0 0
  %94 = vmatpush1.bf16.msra.mxu0 %v73
  %95 = vmatprep.subr.bf16.mxu0 0
  %96 = vmatpush2.bf16.msra.mxu0 0
  %97 = vmatprep.subr.bf16.mxu0 0
  %98 = vmatpush2.bf16.msra.mxu0 0
  %99 = vmatprep.subr.bf16.mxu0 0
  %100 = vmatpush2.bf16.msra.mxu0 0
  %101 = vmatprep.subr.bf16.mxu0 0
  %102 = vmatpush2.bf16.msra.mxu0 0
  %103 = vmatprep.subr.bf16.mxu0 0
  %104 = vmatpush2.bf16.msra.mxu0 0
  %105 = vmatprep.subr.bf16.mxu0 0
  %106 = vmatpush2.bf16.msra.mxu0 0
  %107 = vmatprep.subr.bf16.mxu0 0
  %108 = vmatpush2.bf16.msra.mxu0 0
  %109 = vmatprep.subr.bf16.mxu0 0
  %110 = vmatpush2.bf16.msra.mxu0 0
  %111 = vmatprep.mubr.bf16.mxu0 0
  %112 = vmatmul.mubr.bf16.gmra.mxu0 %v77
  %v113 = vpop.f32.mrf.mxu0
  %v114 = vadd.f32 0.0, %v113
  %v115 = vpop.f32.mrf.mxu0
  %v116 = vpop.f32.mrf.mxu0
  %v117 = vadd.f32 0.0, %v116
  %v118 = vpop.f32.mrf.mxu0
  %119 = vdwg.mxu0
  %v120 = vpack.c.bf16 %v117, %v114
  %vm121 = vcmask 64512
  %v123 = vsel %vm121, %v73, 0
  %vm125 = vcmask 1043456
  %v127 = vsel %vm125, %v62, 0
  %129 = vmatprep.subr.bf16.mxu0 0
  %130 = vmatpush1.bf16.msra.mxu0 0
  %131 = vmatprep.subr.bf16.mxu0 0
  %132 = vmatpush1.bf16.msra.mxu0 0
  %133 = vmatprep.subr.bf16.mxu0 0
  %134 = vmatpush1.bf16.msra.mxu0 0
  %135 = vmatprep.subr.bf16.mxu0 0
  %136 = vmatpush1.bf16.msra.mxu0 0
  %137 = vmatprep.subr.bf16.mxu0 0
  %138 = vmatpush1.bf16.msra.mxu0 0
  %139 = vmatprep.subr.bf16.mxu0 0
  %140 = vmatpush1.bf16.msra.mxu0 0
  %141 = vmatprep.subr.bf16.mxu0 0
  %142 = vmatpush1.bf16.msra.mxu0 0
  %143 = vmatprep.subr.bf16.mxu0 0
  %144 = vmatpush1.bf16.msra.mxu0 %v127
  %145 = vmatprep.subr.bf16.mxu0 0
  %146 = vmatpush2.bf16.msra.mxu0 0
  %147 = vmatprep.subr.bf16.mxu0 0
  %148 = vmatpush2.bf16.msra.mxu0 0
  %149 = vmatprep.subr.bf16.mxu0 0
  %150 = vmatpush2.bf16.msra.mxu0 0
  %151 = vmatprep.subr.bf16.mxu0 0
  %152 = vmatpush2.bf16.msra.mxu0 0
  %153 = vmatprep.subr.bf16.mxu0 0
  %154 = vmatpush2.bf16.msra.mxu0 0
  %155 = vmatprep.subr.bf16.mxu0 0
  %156 = vmatpush2.bf16.msra.mxu0 0
  %157 = vmatprep.subr.bf16.mxu0 0
  %158 = vmatpush2.bf16.msra.mxu0 0
  %159 = vmatprep.subr.bf16.mxu0 0
  %160 = vmatpush2.bf16.msra.mxu0 0
  %161 = vmatprep.mubr.bf16.mxu0 0
  %162 = vmatmul.mubr.bf16.gmra.mxu0 %v123
  %v163 = vpop.f32.mrf.mxu0
  %v164 = vadd.f32 0.0, %v163
  %v165 = vpop.f32.mrf.mxu0
  %v166 = vpop.f32.mrf.mxu0
  %v167 = vadd.f32 0.0, %v166
  %v168 = vpop.f32.mrf.mxu0
  %169 = vdwg.mxu0
  %v171 = vsel %vm121, %v120, 0
  %v174 = vsel %vm125, %v61, 0
  %176 = vmatprep.subr.bf16.mxu0 0
  %177 = vmatpush1.bf16.msra.mxu0 0
  %178 = vmatprep.subr.bf16.mxu0 0
  %179 = vmatpush1.bf16.msra.mxu0 0
  %180 = vmatprep.subr.bf16.mxu0 0
  %181 = vmatpush1.bf16.msra.mxu0 0
  %182 = vmatprep.subr.bf16.mxu0 0
  %183 = vmatpush1.bf16.msra.mxu0 0
  %184 = vmatprep.subr.bf16.mxu0 0
  %185 = vmatpush1.bf16.msra.mxu0 0
  %186 = vmatprep.subr.bf16.mxu0 0
  %187 = vmatpush1.bf16.msra.mxu0 0
  %188 = vmatprep.subr.bf16.mxu0 0
  %189 = vmatpush1.bf16.msra.mxu0 0
  %190 = vmatprep.subr.bf16.mxu0 0
  %191 = vmatpush1.bf16.msra.mxu0 %v174
  %192 = vmatprep.subr.bf16.mxu0 0
  %193 = vmatpush2.bf16.msra.mxu0 0
  %194 = vmatprep.subr.bf16.mxu0 0
  %195 = vmatpush2.bf16.msra.mxu0 0
  %196 = vmatprep.subr.bf16.mxu0 0
  %197 = vmatpush2.bf16.msra.mxu0 0
  %198 = vmatprep.subr.bf16.mxu0 0
  %199 = vmatpush2.bf16.msra.mxu0 0
  %200 = vmatprep.subr.bf16.mxu0 0
  %201 = vmatpush2.bf16.msra.mxu0 0
  %202 = vmatprep.subr.bf16.mxu0 0
  %203 = vmatpush2.bf16.msra.mxu0 0
  %204 = vmatprep.subr.bf16.mxu0 0
  %205 = vmatpush2.bf16.msra.mxu0 0
  %206 = vmatprep.subr.bf16.mxu0 0
  %207 = vmatpush2.bf16.msra.mxu0 0
  %208 = vmatprep.mubr.bf16.mxu0 0
  %209 = vmatmul.mubr.bf16.gmra.mxu0 %v171
  %v210 = vpop.f32.mrf.mxu0
  %v211 = vadd.f32 %v164, %v210
  %v212 = vpop.f32.mrf.mxu0
  %v213 = vpop.f32.mrf.mxu0
  %v214 = vadd.f32 %v167, %v213
  %v215 = vpop.f32.mrf.mxu0
  %216 = vdwg.mxu0
  %v218 = vlaneseq
  %v219 = vshrl.u32 %v218, 7
  %v220 = vsub.s32 0, %v219
  %v221 = vrot.slane %v63, %v220
  %v223 = vadd.f32 %v211, %v221
  %v224 = vadd.f32 %v214, %v221
  %vm225 = vcmp.ge.f32.partialorder %v223, 0.0
  %vm226 = vcmp.ge.f32.partialorder %v224, 0.0
  %v227 = vmul.f32 %v223, 0.01
  %v228 = vmul.f32 %v224, 0.01
  %v229 = vsel %vm225, %v223, %v227
  %v230 = vsel %vm226, %v224, %v228
  %v231 = vpack.c.bf16 %v230, %v229
  %v232 = vld [vmem:[%s5] sm:$0xf]
  %v233 = vld [vmem:[%s5 + $0x4] sm:$0xf]
  %v234 = vld [vmem:[%s5 + $0x8] sm:$0xf]
  %v235 = vld [vmem:[%s5 + $0xc] sm:$0xf]
  %v236 = vld [vmem:[%s6] sm:$0xf]
  %v237 = vld [vmem:[%s6 + $0x4] sm:$0xf]
  %v238 = vld [vmem:[%s6 + $0x8] sm:$0xf]
  %v239 = vld [vmem:[%s6 + $0xc] sm:$0xf]
  %v240 = vld [vmem:[%s7] sm:$0x1]
  %241 = vmatprep.subr.bf16.mxu0 0
  %242 = vmatpush1.bf16.msra.mxu0 0
  %243 = vmatprep.subr.bf16.mxu0 0
  %244 = vmatpush1.bf16.msra.mxu0 0
  %245 = vmatprep.subr.bf16.mxu0 0
  %246 = vmatpush1.bf16.msra.mxu0 0
  %247 = vmatprep.subr.bf16.mxu0 0
  %248 = vmatpush1.bf16.msra.mxu0 0
  %249 = vmatprep.subr.bf16.mxu0 0
  %250 = vmatpush1.bf16.msra.mxu0 0
  %251 = vmatprep.subr.bf16.mxu0 0
  %252 = vmatpush1.bf16.msra.mxu0 0
  %253 = vmatprep.subr.bf16.mxu0 0
  %254 = vmatpush1.bf16.msra.mxu0 0
  %255 = vmatprep.subr.bf16.mxu0 0
  %256 = vmatpush1.bf16.msra.mxu0 %v231
  %257 = vmatprep.subr.bf16.mxu0 0
  %258 = vmatpush2.bf16.msra.mxu0 0
  %259 = vmatprep.subr.bf16.mxu0 0
  %260 = vmatpush2.bf16.msra.mxu0 0
  %261 = vmatprep.subr.bf16.mxu0 0
  %262 = vmatpush2.bf16.msra.mxu0 0
  %263 = vmatprep.subr.bf16.mxu0 0
  %264 = vmatpush2.bf16.msra.mxu0 0
  %265 = vmatprep.subr.bf16.mxu0 0
  %266 = vmatpush2.bf16.msra.mxu0 0
  %267 = vmatprep.subr.bf16.mxu0 0
  %268 = vmatpush2.bf16.msra.mxu0 0
  %269 = vmatprep.subr.bf16.mxu0 0
  %270 = vmatpush2.bf16.msra.mxu0 0
  %271 = vmatprep.subr.bf16.mxu0 0
  %272 = vmatpush2.bf16.msra.mxu0 0
  %273 = vmatprep.mubr.bf16.mxu0 0
  %274 = vmatmul.mubr.bf16.gmra.mxu0 %v77
  %v275 = vpop.f32.mrf.mxu0
  %v276 = vadd.f32 0.0, %v275
  %v277 = vpop.f32.mrf.mxu0
  %v278 = vpop.f32.mrf.mxu0
  %v279 = vadd.f32 0.0, %v278
  %v280 = vpop.f32.mrf.mxu0
  %281 = vdwg.mxu0
  %v282 = vpack.c.bf16 %v279, %v276
  %v287 = vunpack.c.l.b16 %v236
  %v288 = vunpack.c.l.b16 %v237
  %v289 = vunpack.c.l.b16 %v238
  %v290 = vunpack.c.l.b16 %v239
  %v291 = vpack.c.b16 %v288, %v287
  %v292 = vpack.c.b16 %v290, %v289
  %vm295 = vcmask 261120
  %v297 = vsel %vm295, %v231, 0
  %299 = vmatprep.subr.bf16.mxu0 0
  %300 = vmatpush1.bf16.msra.mxu0 0
  %301 = vmatprep.subr.bf16.mxu0 0
  %302 = vmatpush1.bf16.msra.mxu0 0
  %303 = vmatprep.subr.bf16.mxu0 0
  %304 = vmatpush1.bf16.msra.mxu0 0
  %305 = vmatprep.subr.bf16.mxu0 0
  %306 = vmatpush1.bf16.msra.mxu0 0
  %307 = vmatprep.subr.bf16.mxu0 0
  %308 = vmatpush1.bf16.msra.mxu0 0
  %309 = vmatprep.subr.bf16.mxu0 0
  %310 = vmatpush1.bf16.msra.mxu0 0
  %311 = vmatprep.subr.bf16.mxu0 0
  %312 = vmatpush1.bf16.msra.mxu0 %v292
  %313 = vmatprep.subr.bf16.mxu0 0
  %314 = vmatpush1.bf16.msra.mxu0 %v291
  %315 = vmatprep.subr.bf16.mxu0 0
  %316 = vmatpush2.bf16.msra.mxu0 0
  %317 = vmatprep.subr.bf16.mxu0 0
  %318 = vmatpush2.bf16.msra.mxu0 0
  %319 = vmatprep.subr.bf16.mxu0 0
  %320 = vmatpush2.bf16.msra.mxu0 0
  %321 = vmatprep.subr.bf16.mxu0 0
  %322 = vmatpush2.bf16.msra.mxu0 0
  %323 = vmatprep.subr.bf16.mxu0 0
  %324 = vmatpush2.bf16.msra.mxu0 0
  %325 = vmatprep.subr.bf16.mxu0 0
  %326 = vmatpush2.bf16.msra.mxu0 0
  %327 = vmatprep.subr.bf16.mxu0 0
  %328 = vmatpush2.bf16.msra.mxu0 0
  %329 = vmatprep.subr.bf16.mxu0 0
  %330 = vmatpush2.bf16.msra.mxu0 0
  %331 = vmatprep.mubr.bf16.mxu0 0
  %332 = vmatmul.mubr.bf16.gmra.mxu0 %v297
  %v333 = vpop.f32.mrf.mxu0
  %v334 = vadd.f32 0.0, %v333
  %v335 = vpop.f32.mrf.mxu0
  %v336 = vpop.f32.mrf.mxu0
  %v337 = vadd.f32 0.0, %v336
  %v338 = vpop.f32.mrf.mxu0
  %339 = vdwg.mxu0
  %v344 = vunpack.c.l.b16 %v232
  %v345 = vunpack.c.l.b16 %v233
  %v346 = vunpack.c.l.b16 %v234
  %v347 = vunpack.c.l.b16 %v235
  %v348 = vpack.c.b16 %v345, %v344
  %v349 = vpack.c.b16 %v347, %v346
  %v353 = vsel %vm295, %v282, 0
  %355 = vmatprep.subr.bf16.mxu0 0
  %356 = vmatpush1.bf16.msra.mxu0 0
  %357 = vmatprep.subr.bf16.mxu0 0
  %358 = vmatpush1.bf16.msra.mxu0 0
  %359 = vmatprep.subr.bf16.mxu0 0
  %360 = vmatpush1.bf16.msra.mxu0 0
  %361 = vmatprep.subr.bf16.mxu0 0
  %362 = vmatpush1.bf16.msra.mxu0 0
  %363 = vmatprep.subr.bf16.mxu0 0
  %364 = vmatpush1.bf16.msra.mxu0 0
  %365 = vmatprep.subr.bf16.mxu0 0
  %366 = vmatpush1.bf16.msra.mxu0 0
  %367 = vmatprep.subr.bf16.mxu0 0
  %368 = vmatpush1.bf16.msra.mxu0 %v349
  %369 = vmatprep.subr.bf16.mxu0 0
  %370 = vmatpush1.bf16.msra.mxu0 %v348
  %371 = vmatprep.subr.bf16.mxu0 0
  %372 = vmatpush2.bf16.msra.mxu0 0
  %373 = vmatprep.subr.bf16.mxu0 0
  %374 = vmatpush2.bf16.msra.mxu0 0
  %375 = vmatprep.subr.bf16.mxu0 0
  %376 = vmatpush2.bf16.msra.mxu0 0
  %377 = vmatprep.subr.bf16.mxu0 0
  %378 = vmatpush2.bf16.msra.mxu0 0
  %379 = vmatprep.subr.bf16.mxu0 0
  %380 = vmatpush2.bf16.msra.mxu0 0
  %381 = vmatprep.subr.bf16.mxu0 0
  %382 = vmatpush2.bf16.msra.mxu0 0
  %383 = vmatprep.subr.bf16.mxu0 0
  %384 = vmatpush2.bf16.msra.mxu0 0
  %385 = vmatprep.subr.bf16.mxu0 0
  %386 = vmatpush2.bf16.msra.mxu0 0
  %387 = vmatprep.mubr.bf16.mxu0 0
  %388 = vmatmul.mubr.bf16.gmra.mxu0 %v353
  %v389 = vpop.f32.mrf.mxu0
  %v390 = vadd.f32 %v334, %v389
  %v391 = vpop.f32.mrf.mxu0
  %v392 = vpop.f32.mrf.mxu0
  %v393 = vadd.f32 %v337, %v392
  %v394 = vpop.f32.mrf.mxu0
  %395 = vdwg.mxu0
  %v397 = vlaneseq
  %v398 = vshrl.u32 %v397, 7
  %v399 = vsub.s32 0, %v398
  %v400 = vrot.slane %v240, %v399
  %v402 = vadd.f32 %v390, %v400
  %v403 = vadd.f32 %v393, %v400
  %vm404 = vcmp.ge.f32.partialorder %v402, 0.0
  %vm405 = vcmp.ge.f32.partialorder %v403, 0.0
  %v406 = vmul.f32 %v402, 0.01
  %v407 = vmul.f32 %v403, 0.01
  %v408 = vsel %vm404, %v402, %v406
  %v409 = vsel %vm405, %v403, %v407
  %v410 = vpack.c.bf16 %v409, %v408
  %v411 = vld [vmem:[%s8] sm:$0xf]
  %v412 = vld [vmem:[%s8 + $0x4] sm:$0xf]
  %v413 = vld [vmem:[%s8 + $0x8] sm:$0xf]
  %v414 = vld [vmem:[%s8 + $0xc] sm:$0xf]
  %v415 = vld [vmem:[%s9] sm:$0xf]
  %v416 = vld [vmem:[%s9 + $0x4] sm:$0xf]
  %v417 = vld [vmem:[%s9 + $0x8] sm:$0xf]
  %v418 = vld [vmem:[%s9 + $0xc] sm:$0xf]
  %v419 = vld [vmem:[%s10] sm:$0x1]
  %420 = vmatprep.subr.bf16.mxu0 0
  %421 = vmatpush1.bf16.msra.mxu0 0
  %422 = vmatprep.subr.bf16.mxu0 0
  %423 = vmatpush1.bf16.msra.mxu0 0
  %424 = vmatprep.subr.bf16.mxu0 0
  %425 = vmatpush1.bf16.msra.mxu0 0
  %426 = vmatprep.subr.bf16.mxu0 0
  %427 = vmatpush1.bf16.msra.mxu0 0
  %428 = vmatprep.subr.bf16.mxu0 0
  %429 = vmatpush1.bf16.msra.mxu0 0
  %430 = vmatprep.subr.bf16.mxu0 0
  %431 = vmatpush1.bf16.msra.mxu0 0
  %432 = vmatprep.subr.bf16.mxu0 0
  %433 = vmatpush1.bf16.msra.mxu0 0
  %434 = vmatprep.subr.bf16.mxu0 0
  %435 = vmatpush1.bf16.msra.mxu0 %v410
  %436 = vmatprep.subr.bf16.mxu0 0
  %437 = vmatpush2.bf16.msra.mxu0 0
  %438 = vmatprep.subr.bf16.mxu0 0
  %439 = vmatpush2.bf16.msra.mxu0 0
  %440 = vmatprep.subr.bf16.mxu0 0
  %441 = vmatpush2.bf16.msra.mxu0 0
  %442 = vmatprep.subr.bf16.mxu0 0
  %443 = vmatpush2.bf16.msra.mxu0 0
  %444 = vmatprep.subr.bf16.mxu0 0
  %445 = vmatpush2.bf16.msra.mxu0 0
  %446 = vmatprep.subr.bf16.mxu0 0
  %447 = vmatpush2.bf16.msra.mxu0 0
  %448 = vmatprep.subr.bf16.mxu0 0
  %449 = vmatpush2.bf16.msra.mxu0 0
  %450 = vmatprep.subr.bf16.mxu0 0
  %451 = vmatpush2.bf16.msra.mxu0 0
  %452 = vmatprep.mubr.bf16.mxu0 0
  %453 = vmatmul.mubr.bf16.gmra.mxu0 %v77
  %v454 = vpop.f32.mrf.mxu0
  %v455 = vadd.f32 0.0, %v454
  %v456 = vpop.f32.mrf.mxu0
  %v457 = vpop.f32.mrf.mxu0
  %v458 = vadd.f32 0.0, %v457
  %v459 = vpop.f32.mrf.mxu0
  %460 = vdwg.mxu0
  %v461 = vpack.c.bf16 %v458, %v455
  %v466 = vunpack.c.l.b16 %v415
  %v467 = vunpack.c.l.b16 %v416
  %v468 = vunpack.c.l.b16 %v417
  %v469 = vunpack.c.l.b16 %v418
  %v470 = vpack.c.b16 %v467, %v466
  %v471 = vpack.c.b16 %v469, %v468
  %v475 = vsel %vm295, %v410, 0
  %477 = vmatprep.subr.bf16.mxu0 0
  %478 = vmatpush1.bf16.msra.mxu0 0
  %479 = vmatprep.subr.bf16.mxu0 0
  %480 = vmatpush1.bf16.msra.mxu0 0
  %481 = vmatprep.subr.bf16.mxu0 0
  %482 = vmatpush1.bf16.msra.mxu0 0
  %483 = vmatprep.subr.bf16.mxu0 0
  %484 = vmatpush1.bf16.msra.mxu0 0
  %485 = vmatprep.subr.bf16.mxu0 0
  %486 = vmatpush1.bf16.msra.mxu0 0
  %487 = vmatprep.subr.bf16.mxu0 0
  %488 = vmatpush1.bf16.msra.mxu0 0
  %489 = vmatprep.subr.bf16.mxu0 0
  %490 = vmatpush1.bf16.msra.mxu0 %v471
  %491 = vmatprep.subr.bf16.mxu0 0
  %492 = vmatpush1.bf16.msra.mxu0 %v470
  %493 = vmatprep.subr.bf16.mxu0 0
  %494 = vmatpush2.bf16.msra.mxu0 0
  %495 = vmatprep.subr.bf16.mxu0 0
  %496 = vmatpush2.bf16.msra.mxu0 0
  %497 = vmatprep.subr.bf16.mxu0 0
  %498 = vmatpush2.bf16.msra.mxu0 0
  %499 = vmatprep.subr.bf16.mxu0 0
  %500 = vmatpush2.bf16.msra.mxu0 0
  %501 = vmatprep.subr.bf16.mxu0 0
  %502 = vmatpush2.bf16.msra.mxu0 0
  %503 = vmatprep.subr.bf16.mxu0 0
  %504 = vmatpush2.bf16.msra.mxu0 0
  %505 = vmatprep.subr.bf16.mxu0 0
  %506 = vmatpush2.bf16.msra.mxu0 0
  %507 = vmatprep.subr.bf16.mxu0 0
  %508 = vmatpush2.bf16.msra.mxu0 0
  %509 = vmatprep.mubr.bf16.mxu0 0
  %510 = vmatmul.mubr.bf16.gmra.mxu0 %v475
  %v511 = vpop.f32.mrf.mxu0
  %v512 = vadd.f32 0.0, %v511
  %v513 = vpop.f32.mrf.mxu0
  %v514 = vpop.f32.mrf.mxu0
  %v515 = vadd.f32 0.0, %v514
  %v516 = vpop.f32.mrf.mxu0
  %517 = vdwg.mxu0
  %v522 = vunpack.c.l.b16 %v411
  %v523 = vunpack.c.l.b16 %v412
  %v524 = vunpack.c.l.b16 %v413
  %v525 = vunpack.c.l.b16 %v414
  %v526 = vpack.c.b16 %v523, %v522
  %v527 = vpack.c.b16 %v525, %v524
  %v531 = vsel %vm295, %v461, 0
  %533 = vmatprep.subr.bf16.mxu0 0
  %534 = vmatpush1.bf16.msra.mxu0 0
  %535 = vmatprep.subr.bf16.mxu0 0
  %536 = vmatpush1.bf16.msra.mxu0 0
  %537 = vmatprep.subr.bf16.mxu0 0
  %538 = vmatpush1.bf16.msra.mxu0 0
  %539 = vmatprep.subr.bf16.mxu0 0
  %540 = vmatpush1.bf16.msra.mxu0 0
  %541 = vmatprep.subr.bf16.mxu0 0
  %542 = vmatpush1.bf16.msra.mxu0 0
  %543 = vmatprep.subr.bf16.mxu0 0
  %544 = vmatpush1.bf16.msra.mxu0 0
  %545 = vmatprep.subr.bf16.mxu0 0
  %546 = vmatpush1.bf16.msra.mxu0 %v527
  %547 = vmatprep.subr.bf16.mxu0 0
  %548 = vmatpush1.bf16.msra.mxu0 %v526
  %549 = vmatprep.subr.bf16.mxu0 0
  %550 = vmatpush2.bf16.msra.mxu0 0
  %551 = vmatprep.subr.bf16.mxu0 0
  %552 = vmatpush2.bf16.msra.mxu0 0
  %553 = vmatprep.subr.bf16.mxu0 0
  %554 = vmatpush2.bf16.msra.mxu0 0
  %555 = vmatprep.subr.bf16.mxu0 0
  %556 = vmatpush2.bf16.msra.mxu0 0
  %557 = vmatprep.subr.bf16.mxu0 0
  %558 = vmatpush2.bf16.msra.mxu0 0
  %559 = vmatprep.subr.bf16.mxu0 0
  %560 = vmatpush2.bf16.msra.mxu0 0
  %561 = vmatprep.subr.bf16.mxu0 0
  %562 = vmatpush2.bf16.msra.mxu0 0
  %563 = vmatprep.subr.bf16.mxu0 0
  %564 = vmatpush2.bf16.msra.mxu0 0
  %565 = vmatprep.mubr.bf16.mxu0 0
  %566 = vmatmul.mubr.bf16.gmra.mxu0 %v531
  %v567 = vpop.f32.mrf.mxu0
  %v568 = vadd.f32 %v512, %v567
  %v569 = vpop.f32.mrf.mxu0
  %v570 = vpop.f32.mrf.mxu0
  %v571 = vadd.f32 %v515, %v570
  %v572 = vpop.f32.mrf.mxu0
  %573 = vdwg.mxu0
  %v575 = vlaneseq
  %v576 = vshrl.u32 %v575, 7
  %v577 = vsub.s32 0, %v576
  %v578 = vrot.slane %v419, %v577
  %v580 = vadd.f32 %v568, %v578
  %v581 = vadd.f32 %v571, %v578
  %vm582 = vcmp.ge.f32.partialorder %v580, 0.0
  %vm583 = vcmp.ge.f32.partialorder %v581, 0.0
  %v584 = vmul.f32 %v580, 0.01
  %v585 = vmul.f32 %v581, 0.01
  %v586 = vsel %vm582, %v580, %v584
  %v587 = vsel %vm583, %v581, %v585
  %v588 = vpack.c.bf16 %v587, %v586
  %v589 = vld [vmem:[%s11] sm:$0xf]
  %v590 = vld [vmem:[%s11 + $0x4] sm:$0xf]
  %v591 = vld [vmem:[%s11 + $0x8] sm:$0xf]
  %v592 = vld [vmem:[%s11 + $0xc] sm:$0xf]
  %v593 = vld [vmem:[%s12] sm:$0xf]
  %v594 = vld [vmem:[%s12 + $0x4] sm:$0xf]
  %v595 = vld [vmem:[%s12 + $0x8] sm:$0xf]
  %v596 = vld [vmem:[%s12 + $0xc] sm:$0xf]
  %v597 = vld [vmem:[%s13] sm:$0x1]
  %598 = vmatprep.subr.bf16.mxu0 0
  %599 = vmatpush1.bf16.msra.mxu0 0
  %600 = vmatprep.subr.bf16.mxu0 0
  %601 = vmatpush1.bf16.msra.mxu0 0
  %602 = vmatprep.subr.bf16.mxu0 0
  %603 = vmatpush1.bf16.msra.mxu0 0
  %604 = vmatprep.subr.bf16.mxu0 0
  %605 = vmatpush1.bf16.msra.mxu0 0
  %606 = vmatprep.subr.bf16.mxu0 0
  %607 = vmatpush1.bf16.msra.mxu0 0
  %608 = vmatprep.subr.bf16.mxu0 0
  %609 = vmatpush1.bf16.msra.mxu0 0
  %610 = vmatprep.subr.bf16.mxu0 0
  %611 = vmatpush1.bf16.msra.mxu0 0
  %612 = vmatprep.subr.bf16.mxu0 0
  %613 = vmatpush1.bf16.msra.mxu0 %v588
  %614 = vmatprep.subr.bf16.mxu0 0
  %615 = vmatpush2.bf16.msra.mxu0 0
  %616 = vmatprep.subr.bf16.mxu0 0
  %617 = vmatpush2.bf16.msra.mxu0 0
  %618 = vmatprep.subr.bf16.mxu0 0
  %619 = vmatpush2.bf16.msra.mxu0 0
  %620 = vmatprep.subr.bf16.mxu0 0
  %621 = vmatpush2.bf16.msra.mxu0 0
  %622 = vmatprep.subr.bf16.mxu0 0
  %623 = vmatpush2.bf16.msra.mxu0 0
  %624 = vmatprep.subr.bf16.mxu0 0
  %625 = vmatpush2.bf16.msra.mxu0 0
  %626 = vmatprep.subr.bf16.mxu0 0
  %627 = vmatpush2.bf16.msra.mxu0 0
  %628 = vmatprep.subr.bf16.mxu0 0
  %629 = vmatpush2.bf16.msra.mxu0 0
  %630 = vmatprep.mubr.bf16.mxu0 0
  %631 = vmatmul.mubr.bf16.gmra.mxu0 %v77
  %v632 = vpop.f32.mrf.mxu0
  %v633 = vadd.f32 0.0, %v632
  %v634 = vpop.f32.mrf.mxu0
  %v635 = vpop.f32.mrf.mxu0
  %v636 = vadd.f32 0.0, %v635
  %v637 = vpop.f32.mrf.mxu0
  %638 = vdwg.mxu0
  %v639 = vpack.c.bf16 %v636, %v633
  %v644 = vunpack.c.l.b16 %v593
  %v645 = vunpack.c.l.b16 %v594
  %v646 = vunpack.c.l.b16 %v595
  %v647 = vunpack.c.l.b16 %v596
  %v648 = vpack.c.b16 %v645, %v644
  %v649 = vpack.c.b16 %v647, %v646
  %v653 = vsel %vm295, %v588, 0
  %655 = vmatprep.subr.bf16.mxu0 0
  %656 = vmatpush1.bf16.msra.mxu0 0
  %657 = vmatprep.subr.bf16.mxu0 0
  %658 = vmatpush1.bf16.msra.mxu0 0
  %659 = vmatprep.subr.bf16.mxu0 0
  %660 = vmatpush1.bf16.msra.mxu0 0
  %661 = vmatprep.subr.bf16.mxu0 0
  %662 = vmatpush1.bf16.msra.mxu0 0
  %663 = vmatprep.subr.bf16.mxu0 0
  %664 = vmatpush1.bf16.msra.mxu0 0
  %665 = vmatprep.subr.bf16.mxu0 0
  %666 = vmatpush1.bf16.msra.mxu0 0
  %667 = vmatprep.subr.bf16.mxu0 0
  %668 = vmatpush1.bf16.msra.mxu0 %v649
  %669 = vmatprep.subr.bf16.mxu0 0
  %670 = vmatpush1.bf16.msra.mxu0 %v648
  %671 = vmatprep.subr.bf16.mxu0 0
  %672 = vmatpush2.bf16.msra.mxu0 0
  %673 = vmatprep.subr.bf16.mxu0 0
  %674 = vmatpush2.bf16.msra.mxu0 0
  %675 = vmatprep.subr.bf16.mxu0 0
  %676 = vmatpush2.bf16.msra.mxu0 0
  %677 = vmatprep.subr.bf16.mxu0 0
  %678 = vmatpush2.bf16.msra.mxu0 0
  %679 = vmatprep.subr.bf16.mxu0 0
  %680 = vmatpush2.bf16.msra.mxu0 0
  %681 = vmatprep.subr.bf16.mxu0 0
  %682 = vmatpush2.bf16.msra.mxu0 0
  %683 = vmatprep.subr.bf16.mxu0 0
  %684 = vmatpush2.bf16.msra.mxu0 0
  %685 = vmatprep.subr.bf16.mxu0 0
  %686 = vmatpush2.bf16.msra.mxu0 0
  %687 = vmatprep.mubr.bf16.mxu0 0
  %688 = vmatmul.mubr.bf16.gmra.mxu0 %v653
  %v689 = vpop.f32.mrf.mxu0
  %v690 = vadd.f32 0.0, %v689
  %v691 = vpop.f32.mrf.mxu0
  %v692 = vpop.f32.mrf.mxu0
  %v693 = vadd.f32 0.0, %v692
  %v694 = vpop.f32.mrf.mxu0
  %695 = vdwg.mxu0
  %v700 = vunpack.c.l.b16 %v589
  %v701 = vunpack.c.l.b16 %v590
  %v702 = vunpack.c.l.b16 %v591
  %v703 = vunpack.c.l.b16 %v592
  %v704 = vpack.c.b16 %v701, %v700
  %v705 = vpack.c.b16 %v703, %v702
  %v709 = vsel %vm295, %v639, 0
  %711 = vmatprep.subr.bf16.mxu0 0
  %712 = vmatpush1.bf16.msra.mxu0 0
  %713 = vmatprep.subr.bf16.mxu0 0
  %714 = vmatpush1.bf16.msra.mxu0 0
  %715 = vmatprep.subr.bf16.mxu0 0
  %716 = vmatpush1.bf16.msra.mxu0 0
  %717 = vmatprep.subr.bf16.mxu0 0
  %718 = vmatpush1.bf16.msra.mxu0 0
  %719 = vmatprep.subr.bf16.mxu0 0
  %720 = vmatpush1.bf16.msra.mxu0 0
  %721 = vmatprep.subr.bf16.mxu0 0
  %722 = vmatpush1.bf16.msra.mxu0 0
  %723 = vmatprep.subr.bf16.mxu0 0
  %724 = vmatpush1.bf16.msra.mxu0 %v705
  %725 = vmatprep.subr.bf16.mxu0 0
  %726 = vmatpush1.bf16.msra.mxu0 %v704
  %727 = vmatprep.subr.bf16.mxu0 0
  %728 = vmatpush2.bf16.msra.mxu0 0
  %729 = vmatprep.subr.bf16.mxu0 0
  %730 = vmatpush2.bf16.msra.mxu0 0
  %731 = vmatprep.subr.bf16.mxu0 0
  %732 = vmatpush2.bf16.msra.mxu0 0
  %733 = vmatprep.subr.bf16.mxu0 0
  %734 = vmatpush2.bf16.msra.mxu0 0
  %735 = vmatprep.subr.bf16.mxu0 0
  %736 = vmatpush2.bf16.msra.mxu0 0
  %737 = vmatprep.subr.bf16.mxu0 0
  %738 = vmatpush2.bf16.msra.mxu0 0
  %739 = vmatprep.subr.bf16.mxu0 0
  %740 = vmatpush2.bf16.msra.mxu0 0
  %741 = vmatprep.subr.bf16.mxu0 0
  %742 = vmatpush2.bf16.msra.mxu0 0
  %743 = vmatprep.mubr.bf16.mxu0 0
  %744 = vmatmul.mubr.bf16.gmra.mxu0 %v709
  %v745 = vpop.f32.mrf.mxu0
  %v746 = vadd.f32 %v690, %v745
  %v747 = vpop.f32.mrf.mxu0
  %v748 = vpop.f32.mrf.mxu0
  %v749 = vadd.f32 %v693, %v748
  %v750 = vpop.f32.mrf.mxu0
  %751 = vdwg.mxu0
  %v753 = vlaneseq
  %v754 = vshrl.u32 %v753, 7
  %v755 = vsub.s32 0, %v754
  %v756 = vrot.slane %v597, %v755
  %v758 = vadd.f32 %v746, %v756
  %v759 = vadd.f32 %v749, %v756
  %v760 = vpack.c.bf16 %v759, %v758
  %v761 = vld [vmem:[%s14] sm:$0xf]
  %v762 = vld [vmem:[%s14 + $0x4] sm:$0xf]
  %v763 = vld [vmem:[%s15] sm:$0xf]
  %v764 = vld [vmem:[%s15 + $0x4] sm:$0xf]
  %v765 = vld [vmem:[%s16] sm:$0x1]
  %766 = vmatprep.subr.bf16.mxu0 0
  %767 = vmatpush1.bf16.msra.mxu0 0
  %768 = vmatprep.subr.bf16.mxu0 0
  %769 = vmatpush1.bf16.msra.mxu0 0
  %770 = vmatprep.subr.bf16.mxu0 0
  %771 = vmatpush1.bf16.msra.mxu0 0
  %772 = vmatprep.subr.bf16.mxu0 0
  %773 = vmatpush1.bf16.msra.mxu0 0
  %774 = vmatprep.subr.bf16.mxu0 0
  %775 = vmatpush1.bf16.msra.mxu0 0
  %776 = vmatprep.subr.bf16.mxu0 0
  %777 = vmatpush1.bf16.msra.mxu0 0
  %778 = vmatprep.subr.bf16.mxu0 0
  %779 = vmatpush1.bf16.msra.mxu0 0
  %780 = vmatprep.subr.bf16.mxu0 0
  %781 = vmatpush1.bf16.msra.mxu0 %v760
  %782 = vmatprep.subr.bf16.mxu0 0
  %783 = vmatpush2.bf16.msra.mxu0 0
  %784 = vmatprep.subr.bf16.mxu0 0
  %785 = vmatpush2.bf16.msra.mxu0 0
  %786 = vmatprep.subr.bf16.mxu0 0
  %787 = vmatpush2.bf16.msra.mxu0 0
  %788 = vmatprep.subr.bf16.mxu0 0
  %789 = vmatpush2.bf16.msra.mxu0 0
  %790 = vmatprep.subr.bf16.mxu0 0
  %791 = vmatpush2.bf16.msra.mxu0 0
  %792 = vmatprep.subr.bf16.mxu0 0
  %793 = vmatpush2.bf16.msra.mxu0 0
  %794 = vmatprep.subr.bf16.mxu0 0
  %795 = vmatpush2.bf16.msra.mxu0 0
  %796 = vmatprep.subr.bf16.mxu0 0
  %797 = vmatpush2.bf16.msra.mxu0 0
  %798 = vmatprep.mubr.bf16.mxu0 0
  %799 = vmatmul.mubr.bf16.gmra.mxu0 %v77
  %v800 = vpop.f32.mrf.mxu0
  %v801 = vadd.f32 0.0, %v800
  %v802 = vpop.f32.mrf.mxu0
  %v803 = vpop.f32.mrf.mxu0
  %v804 = vadd.f32 0.0, %v803
  %v805 = vpop.f32.mrf.mxu0
  %806 = vdwg.mxu0
  %v807 = vpack.c.bf16 %v804, %v801
  %v810 = vunpack.c.l.b16 %v763
  %v811 = vunpack.c.l.b16 %v764
  %v812 = vpack.c.b16 %v811, %v810
  %v815 = vsel %vm75, %v760, 0
  %817 = vmatprep.subr.bf16.mxu0 0
  %818 = vmatpush1.bf16.msra.mxu0 0
  %819 = vmatprep.subr.bf16.mxu0 0
  %820 = vmatpush1.bf16.msra.mxu0 0
  %821 = vmatprep.subr.bf16.mxu0 0
  %822 = vmatpush1.bf16.msra.mxu0 0
  %823 = vmatprep.subr.bf16.mxu0 0
  %824 = vmatpush1.bf16.msra.mxu0 0
  %825 = vmatprep.subr.bf16.mxu0 0
  %826 = vmatpush1.bf16.msra.mxu0 0
  %827 = vmatprep.subr.bf16.mxu0 0
  %828 = vmatpush1.bf16.msra.mxu0 0
  %829 = vmatprep.subr.bf16.mxu0 0
  %830 = vmatpush1.bf16.msra.mxu0 0
  %831 = vmatprep.subr.bf16.mxu0 0
  %832 = vmatpush1.bf16.msra.mxu0 %v812
  %833 = vmatprep.subr.bf16.mxu0 0
  %834 = vmatpush2.bf16.msra.mxu0 0
  %835 = vmatprep.subr.bf16.mxu0 0
  %836 = vmatpush2.bf16.msra.mxu0 0
  %837 = vmatprep.subr.bf16.mxu0 0
  %838 = vmatpush2.bf16.msra.mxu0 0
  %839 = vmatprep.subr.bf16.mxu0 0
  %840 = vmatpush2.bf16.msra.mxu0 0
  %841 = vmatprep.subr.bf16.mxu0 0
  %842 = vmatpush2.bf16.msra.mxu0 0
  %843 = vmatprep.subr.bf16.mxu0 0
  %844 = vmatpush2.bf16.msra.mxu0 0
  %845 = vmatprep.subr.bf16.mxu0 0
  %846 = vmatpush2.bf16.msra.mxu0 0
  %847 = vmatprep.subr.bf16.mxu0 0
  %848 = vmatpush2.bf16.msra.mxu0 0
  %849 = vmatprep.mubr.bf16.mxu0 0
  %850 = vmatmul.mubr.bf16.gmra.mxu0 %v815
  %v851 = vpop.f32.mrf.mxu0
  %v852 = vadd.f32 0.0, %v851
  %v853 = vpop.f32.mrf.mxu0
  %v854 = vpop.f32.mrf.mxu0
  %v855 = vadd.f32 0.0, %v854
  %v856 = vpop.f32.mrf.mxu0
  %857 = vdwg.mxu0
  %v860 = vunpack.c.l.b16 %v761
  %v861 = vunpack.c.l.b16 %v762
  %v862 = vpack.c.b16 %v861, %v860
  %v865 = vsel %vm75, %v807, 0
  %867 = vmatprep.subr.bf16.mxu0 0
  %868 = vmatpush1.bf16.msra.mxu0 0
  %869 = vmatprep.subr.bf16.mxu0 0
  %870 = vmatpush1.bf16.msra.mxu0 0
  %871 = vmatprep.subr.bf16.mxu0 0
  %872 = vmatpush1.bf16.msra.mxu0 0
  %873 = vmatprep.subr.bf16.mxu0 0
  %874 = vmatpush1.bf16.msra.mxu0 0
  %875 = vmatprep.subr.bf16.mxu0 0
  %876 = vmatpush1.bf16.msra.mxu0 0
  %877 = vmatprep.subr.bf16.mxu0 0
  %878 = vmatpush1.bf16.msra.mxu0 0
  %879 = vmatprep.subr.bf16.mxu0 0
  %880 = vmatpush1.bf16.msra.mxu0 0
  %881 = vmatprep.subr.bf16.mxu0 0
  %882 = vmatpush1.bf16.msra.mxu0 %v862
  %883 = vmatprep.subr.bf16.mxu0 0
  %884 = vmatpush2.bf16.msra.mxu0 0
  %885 = vmatprep.subr.bf16.mxu0 0
  %886 = vmatpush2.bf16.msra.mxu0 0
  %887 = vmatprep.subr.bf16.mxu0 0
  %888 = vmatpush2.bf16.msra.mxu0 0
  %889 = vmatprep.subr.bf16.mxu0 0
  %890 = vmatpush2.bf16.msra.mxu0 0
  %891 = vmatprep.subr.bf16.mxu0 0
  %892 = vmatpush2.bf16.msra.mxu0 0
  %893 = vmatprep.subr.bf16.mxu0 0
  %894 = vmatpush2.bf16.msra.mxu0 0
  %895 = vmatprep.subr.bf16.mxu0 0
  %896 = vmatpush2.bf16.msra.mxu0 0
  %897 = vmatprep.subr.bf16.mxu0 0
  %898 = vmatpush2.bf16.msra.mxu0 0
  %899 = vmatprep.mubr.bf16.mxu0 0
  %900 = vmatmul.mubr.bf16.gmra.mxu0 %v865
  %v901 = vpop.f32.mrf.mxu0
  %v902 = vadd.f32 %v852, %v901
  %v903 = vpop.f32.mrf.mxu0
  %v904 = vpop.f32.mrf.mxu0
  %v905 = vadd.f32 %v855, %v904
  %v906 = vpop.f32.mrf.mxu0
  %907 = vdwg.mxu0
  %v909 = vlaneseq
  %v910 = vshrl.u32 %v909, 7
  %v911 = vsub.s32 0, %v910
  %v912 = vrot.slane %v765, %v911
  %v914 = vadd.f32 %v902, %v912
  %v915 = vadd.f32 %v905, %v912
  %916 = vst.msk [vmem:[%s17] sm:$0xff] %vm75, %v914
  %917 = vst.msk [vmem:[%s17 + $0x8] sm:$0xff] %vm75, %v915
  // Predicated region
  $region70: #{variational_gcn_encoder.1} parent=0 // pred_check
    _
  $region71: #{variational_gcn_encoder.1} parent=0 // pred_check_branch
    %919 = sbr.rel (0) target = $region73
  $region72: #{variational_gcn_encoder.1} parent=0 // pred_region
    _
  $region73: #{variational_gcn_encoder.1} parent=0 // pred_fallthru
    _
  // Predicated region
  $region74: #{variational_gcn_encoder.1} parent=0 // pred_check
    _
  $region75: #{variational_gcn_encoder.1} parent=0 // pred_check_branch
    %921 = sbr.rel (0) target = $region77
  $region76: #{variational_gcn_encoder.1} parent=0 // pred_region
    _
  $region77: #{variational_gcn_encoder.1} parent=0 // pred_fallthru
    _

</llo_original>
